<compile_context>
chip_gen: v6e
topology: v6e:2x2x1
jax: 0.10.0
libtpu: 0.0.40
codegen_flags: <defaults>
</compile_context>

<pallas_src>
import numpy as np
import jax
import jax.numpy as jnp
from jax.experimental import pallas as pl
from jax.experimental.pallas import tpu as pltpu

H = W = 7
C_IN = 128
C_OUT = 32
P = H * W            # 49 valid spatial positions
P_PAD = 56           # padded to a multiple of 8 sublanes
MARGIN = 8           # scratch margin so every shifted window load stays in-bounds
K = 9                # 3x3 taps, k = ky*3 + kx
EPS = 1e-5

# flattened-row offset for each 3x3 tap
_OFFSETS = tuple((ky - 1) * W + (kx - 1) for ky in range(3) for kx in range(3))


def bn_relu_conv_kernel(x_ref, gamma_ref, beta_ref, mask_ref, w_ref, o_ref, buf_ref):
    # x_ref:    (P_PAD, C_IN)   flattened NHWC activations, rows >= P are zero
    # gamma_ref/beta_ref: (1, C_IN)
    # mask_ref: (P_PAD, K)      0/1 validity of tap k at output position p
    # w_ref:    (K*C_IN, C_OUT) conv weights, row index = k*C_IN + ci
    # o_ref:    (P_PAD, C_OUT)
    # buf_ref:  (P_PAD + 2*MARGIN, C_IN) scratch for shifted-window reads
    x = x_ref[...]

    # ---- BatchNorm2d (training-mode forward) folded to per-channel scale/bias ----
    # Padded rows are zero, so summing all P_PAD rows and dividing by P gives the
    # statistics over the true 49 positions.
    s1 = jnp.sum(x, axis=0, keepdims=True)
    s2 = jnp.sum(x * x, axis=0, keepdims=True)
    mean = s1 * (1.0 / P)
    var = jnp.maximum(s2 * (1.0 / P) - mean * mean, 0.0)     # biased variance
    scale = jax.lax.rsqrt(var + EPS) * gamma_ref[...]
    bias = beta_ref[...] - mean * scale

    # ---- BN affine + ReLU: one mul + add + max per element ----
    a = jnp.maximum(x * scale + bias, 0.0)                   # (P_PAD, C_IN)

    # ---- im2col via shifted window loads (no MXU data-movement matmuls) ----
    buf_ref[...] = jnp.zeros((P_PAD + 2 * MARGIN, C_IN), jnp.float32)
    buf_ref[pl.ds(MARGIN, P_PAD), :] = a

    cols = []
    for k, off in enumerate(_OFFSETS):
        shifted = buf_ref[pl.ds(MARGIN + off, P_PAD), :]     # (P_PAD, C_IN)
        cols.append(shifted * mask_ref[:, k:k + 1])          # zero invalid boundary taps
    patches = jnp.concatenate(cols, axis=1)                  # (P_PAD, K*C_IN) lane-dense

    # ---- single MXU matmul with f32 accumulation ----
    o_ref[...] = jnp.dot(patches, w_ref[...], preferred_element_type=jnp.float32)


def _build_tap_masks():
    """mask[p, k] = 1 iff output position p may read tap k (spatially in-bounds)."""
    m = np.zeros((P_PAD, K), np.float32)
    for p in range(P):
        h, w = divmod(p, W)
        for k in range(K):
            ky, kx = divmod(k, 3)
            hh, ww = h + ky - 1, w + kx - 1
            if 0 <= hh < H and 0 <= ww < W:
                m[p, k] = 1.0
    return jnp.asarray(m)


def bn_relu_conv(x_nchw, gamma, beta, w_oihw):
    # wrapper: layout changes only; all compute happens in the Pallas kernel.
    n, c, h, w = x_nchw.shape
    assert (n, c, h, w) == (1, C_IN, H, W)

    x2d = jnp.transpose(x_nchw, (0, 2, 3, 1)).reshape(P, C_IN)
    x2d = jnp.pad(x2d, ((0, P_PAD - P), (0, 0)))                           # zero rows 49..55
    w_flat = jnp.transpose(w_oihw, (2, 3, 1, 0)).reshape(K * C_IN, C_OUT)  # ((ky*3+kx)*C_IN+ci, co)
    masks = _build_tap_masks()

    cost = pl.CostEstimate(
        flops=2 * P_PAD * (K * C_IN) * C_OUT + 12 * P_PAD * C_IN,
        transcendentals=C_IN,
        bytes_accessed=4 * (P_PAD * C_IN + 2 * C_IN + P_PAD * K
                            + K * C_IN * C_OUT + P_PAD * C_OUT),
    )

    out2d = pl.pallas_call(
        bn_relu_conv_kernel,
        out_shape=jax.ShapeDtypeStruct((P_PAD, C_OUT), jnp.float32),
        in_specs=[
            pl.BlockSpec(memory_space=pltpu.MemorySpace.VMEM),  # x2d
            pl.BlockSpec(memory_space=pltpu.MemorySpace.VMEM),  # gamma
            pl.BlockSpec(memory_space=pltpu.MemorySpace.VMEM),  # beta
            pl.BlockSpec(memory_space=pltpu.MemorySpace.VMEM),  # tap masks
            pl.BlockSpec(memory_space=pltpu.MemorySpace.VMEM),  # conv weights
        ],
        out_specs=pl.BlockSpec(memory_space=pltpu.MemorySpace.VMEM),
        scratch_shapes=[pltpu.VMEM((P_PAD + 2 * MARGIN, C_IN), jnp.float32)],
        cost_estimate=cost,
    )(x2d, gamma.reshape(1, C_IN), beta.reshape(1, C_IN), masks, w_flat)

    # drop padded rows, back to PyTorch NCHW
    return jnp.transpose(out2d[:P].reshape(1, H, W, C_OUT), (0, 3, 1, 2))


if __name__ == "__main__":
    key = jax.random.PRNGKey(0)
    kx, kg, kb, kw = jax.random.split(key, 4)

    # deterministic input + parameters (perturb gamma/beta so the affine path is exercised)
    x = jax.random.normal(kx, (1, C_IN, H, W), jnp.float32)
    gamma = 1.0 + 0.1 * jax.random.normal(kg, (C_IN,), jnp.float32)
    beta = 0.1 * jax.random.normal(kb, (C_IN,), jnp.float32)
    w_conv = 0.05 * jax.random.normal(kw, (C_OUT, C_IN, 3, 3), jnp.float32)

    out = bn_relu_conv(x, gamma, beta, w_conv)
    jax.block_until_ready(out)

    # sanity check against a pure-JAX reference of the same math (PyTorch training-mode BN)
    xn = jnp.transpose(x, (0, 2, 3, 1))
    mean = jnp.mean(xn, axis=(0, 1, 2))
    var = jnp.mean(jnp.square(xn - mean), axis=(0, 1, 2))
    a_ref = jnp.maximum((xn - mean) * jax.lax.rsqrt(var + EPS) * gamma + beta, 0.0)
    ref = jax.lax.conv_general_dilated(
        a_ref, jnp.transpose(w_conv, (2, 3, 1, 0)),
        window_strides=(1, 1), padding="SAME",
        dimension_numbers=("NHWC", "HWIO", "NHWC"))
    ref = jnp.transpose(ref, (0, 3, 1, 2))
    assert out.shape == (1, C_OUT, H, W)
    np.testing.assert_allclose(np.asarray(out), np.asarray(ref), rtol=1e-4, atol=1e-4)

    print("KERNEL_OK")
</pallas_src>

<mosaic_0001>
module attributes {stable_mosaic.version = 11 : i64} {
  func.func @bn_relu_conv_kernel(%arg0: memref<56x128xf32, #tpu.memory_space<vmem>>, %arg1: memref<1x128xf32, #tpu.memory_space<vmem>>, %arg2: memref<1x128xf32, #tpu.memory_space<vmem>>, %arg3: memref<56x9xf32, #tpu.memory_space<vmem>>, %arg4: memref<1152x32xf32, #tpu.memory_space<vmem>>, %arg5: memref<56x32xf32, #tpu.memory_space<vmem>>, %arg6: memref<72x128xf32, #tpu.memory_space<vmem>>) attributes {dimension_semantics = [], scalar_prefetch = 0 : i64, scratch_operands = 1 : i64, tpu.core_type = #tpu.core_type<tc>} {
    %c0 = arith.constant 0 : index
    %c0_0 = arith.constant 0 : index
    %0 = vector.load %arg0[%c0, %c0_0] : memref<56x128xf32, #tpu.memory_space<vmem>>, vector<56x128xf32>
    %cst = arith.constant dense<0.000000e+00> : vector<128xf32>
    %1 = vector.multi_reduction <add>, %0, %cst [0] : vector<56x128xf32> to vector<128xf32>
    %2 = vector.shape_cast %1 : vector<128xf32> to vector<1x128xf32>
    %3 = arith.mulf %0, %0 : vector<56x128xf32>
    %cst_1 = arith.constant dense<0.000000e+00> : vector<128xf32>
    %4 = vector.multi_reduction <add>, %3, %cst_1 [0] : vector<56x128xf32> to vector<128xf32>
    %5 = vector.shape_cast %4 : vector<128xf32> to vector<1x128xf32>
    %cst_2 = arith.constant 0.0204081628 : f32
    %6 = vector.broadcast %cst_2 : f32 to vector<1x128xf32>
    %7 = arith.mulf %2, %6 : vector<1x128xf32>
    %cst_3 = arith.constant 0.0204081628 : f32
    %8 = vector.broadcast %cst_3 : f32 to vector<1x128xf32>
    %9 = arith.mulf %5, %8 : vector<1x128xf32>
    %10 = arith.mulf %7, %7 : vector<1x128xf32>
    %11 = arith.subf %9, %10 : vector<1x128xf32>
    %cst_4 = arith.constant 0.000000e+00 : f32
    %12 = vector.broadcast %cst_4 : f32 to vector<1x128xf32>
    %13 = arith.maximumf %11, %12 : vector<1x128xf32>
    %cst_5 = arith.constant 9.99999974E-6 : f32
    %14 = vector.broadcast %cst_5 : f32 to vector<1x128xf32>
    %15 = arith.addf %13, %14 : vector<1x128xf32>
    %16 = math.rsqrt %15 : vector<1x128xf32>
    %c0_6 = arith.constant 0 : index
    %c0_7 = arith.constant 0 : index
    %17 = vector.load %arg1[%c0_6, %c0_7] : memref<1x128xf32, #tpu.memory_space<vmem>>, vector<1x128xf32>
    %18 = arith.mulf %16, %17 : vector<1x128xf32>
    %c0_8 = arith.constant 0 : index
    %c0_9 = arith.constant 0 : index
    %19 = vector.load %arg2[%c0_8, %c0_9] : memref<1x128xf32, #tpu.memory_space<vmem>>, vector<1x128xf32>
    %20 = arith.mulf %7, %18 : vector<1x128xf32>
    %21 = arith.subf %19, %20 : vector<1x128xf32>
    %22 = vector.broadcast %18 : vector<1x128xf32> to vector<56x128xf32>
    %23 = arith.mulf %0, %22 : vector<56x128xf32>
    %24 = vector.broadcast %21 : vector<1x128xf32> to vector<56x128xf32>
    %25 = arith.addf %23, %24 : vector<56x128xf32>
    %cst_10 = arith.constant 0.000000e+00 : f32
    %26 = vector.broadcast %cst_10 : f32 to vector<56x128xf32>
    %27 = arith.maximumf %25, %26 : vector<56x128xf32>
    %cst_11 = arith.constant 0.000000e+00 : f32
    %28 = vector.broadcast %cst_11 : f32 to vector<72x128xf32>
    %c0_12 = arith.constant 0 : index
    %c0_13 = arith.constant 0 : index
    %29 = vector.load %arg6[%c0_12, %c0_13] : memref<72x128xf32, #tpu.memory_space<vmem>>, vector<72x128xf32>
    tpu.vector_store %arg6[%c0_12, %c0_13], %28 {strides = array<i32>} : memref<72x128xf32, #tpu.memory_space<vmem>>, vector<72x128xf32>,
    %c8 = arith.constant 8 : index
    %c0_14 = arith.constant 0 : index
    %30 = vector.load %arg6[%c8, %c0_14] : memref<72x128xf32, #tpu.memory_space<vmem>>, vector<56x128xf32>
    tpu.vector_store %arg6[%c8, %c0_14], %27 {strides = array<i32>} : memref<72x128xf32, #tpu.memory_space<vmem>>, vector<56x128xf32>,
    %c0_15 = arith.constant 0 : index
    %c0_16 = arith.constant 0 : index
    %31 = vector.load %arg6[%c0_15, %c0_16] : memref<72x128xf32, #tpu.memory_space<vmem>>, vector<56x128xf32>
    %c0_17 = arith.constant 0 : index
    %c0_18 = arith.constant 0 : index
    %32 = vector.load %arg3[%c0_17, %c0_18] : memref<56x9xf32, #tpu.memory_space<vmem>>, vector<56x1xf32>
    %33 = vector.broadcast %32 : vector<56x1xf32> to vector<56x128xf32>
    %34 = arith.mulf %31, %33 : vector<56x128xf32>
    %c1 = arith.constant 1 : index
    %c0_19 = arith.constant 0 : index
    %35 = vector.load %arg6[%c1, %c0_19] : memref<72x128xf32, #tpu.memory_space<vmem>>, vector<56x128xf32>
    %c0_20 = arith.constant 0 : index
    %c1_21 = arith.constant 1 : index
    %36 = vector.load %arg3[%c0_20, %c1_21] : memref<56x9xf32, #tpu.memory_space<vmem>>, vector<56x1xf32>
    %37 = vector.broadcast %36 : vector<56x1xf32> to vector<56x128xf32>
    %38 = arith.mulf %35, %37 : vector<56x128xf32>
    %c2 = arith.constant 2 : index
    %c0_22 = arith.constant 0 : index
    %39 = vector.load %arg6[%c2, %c0_22] : memref<72x128xf32, #tpu.memory_space<vmem>>, vector<56x128xf32>
    %c0_23 = arith.constant 0 : index
    %c2_24 = arith.constant 2 : index
    %40 = vector.load %arg3[%c0_23, %c2_24] : memref<56x9xf32, #tpu.memory_space<vmem>>, vector<56x1xf32>
    %41 = vector.broadcast %40 : vector<56x1xf32> to vector<56x128xf32>
    %42 = arith.mulf %39, %41 : vector<56x128xf32>
    %c7 = arith.constant 7 : index
    %c0_25 = arith.constant 0 : index
    %43 = vector.load %arg6[%c7, %c0_25] : memref<72x128xf32, #tpu.memory_space<vmem>>, vector<56x128xf32>
    %c0_26 = arith.constant 0 : index
    %c3 = arith.constant 3 : index
    %44 = vector.load %arg3[%c0_26, %c3] : memref<56x9xf32, #tpu.memory_space<vmem>>, vector<56x1xf32>
    %45 = vector.broadcast %44 : vector<56x1xf32> to vector<56x128xf32>
    %46 = arith.mulf %43, %45 : vector<56x128xf32>
    %c8_27 = arith.constant 8 : index
    %c0_28 = arith.constant 0 : index
    %47 = vector.load %arg6[%c8_27, %c0_28] : memref<72x128xf32, #tpu.memory_space<vmem>>, vector<56x128xf32>
    %c0_29 = arith.constant 0 : index
    %c4 = arith.constant 4 : index
    %48 = vector.load %arg3[%c0_29, %c4] : memref<56x9xf32, #tpu.memory_space<vmem>>, vector<56x1xf32>
    %49 = vector.broadcast %48 : vector<56x1xf32> to vector<56x128xf32>
    %50 = arith.mulf %47, %49 : vector<56x128xf32>
    %c9 = arith.constant 9 : index
    %c0_30 = arith.constant 0 : index
    %51 = vector.load %arg6[%c9, %c0_30] : memref<72x128xf32, #tpu.memory_space<vmem>>, vector<56x128xf32>
    %c0_31 = arith.constant 0 : index
    %c5 = arith.constant 5 : index
    %52 = vector.load %arg3[%c0_31, %c5] : memref<56x9xf32, #tpu.memory_space<vmem>>, vector<56x1xf32>
    %53 = vector.broadcast %52 : vector<56x1xf32> to vector<56x128xf32>
    %54 = arith.mulf %51, %53 : vector<56x128xf32>
    %c14 = arith.constant 14 : index
    %c0_32 = arith.constant 0 : index
    %55 = vector.load %arg6[%c14, %c0_32] : memref<72x128xf32, #tpu.memory_space<vmem>>, vector<56x128xf32>
    %c0_33 = arith.constant 0 : index
    %c6 = arith.constant 6 : index
    %56 = vector.load %arg3[%c0_33, %c6] : memref<56x9xf32, #tpu.memory_space<vmem>>, vector<56x1xf32>
    %57 = vector.broadcast %56 : vector<56x1xf32> to vector<56x128xf32>
    %58 = arith.mulf %55, %57 : vector<56x128xf32>
    %c15 = arith.constant 15 : index
    %c0_34 = arith.constant 0 : index
    %59 = vector.load %arg6[%c15, %c0_34] : memref<72x128xf32, #tpu.memory_space<vmem>>, vector<56x128xf32>
    %c0_35 = arith.constant 0 : index
    %c7_36 = arith.constant 7 : index
    %60 = vector.load %arg3[%c0_35, %c7_36] : memref<56x9xf32, #tpu.memory_space<vmem>>, vector<56x1xf32>
    %61 = vector.broadcast %60 : vector<56x1xf32> to vector<56x128xf32>
    %62 = arith.mulf %59, %61 : vector<56x128xf32>
    %c16 = arith.constant 16 : index
    %c0_37 = arith.constant 0 : index
    %63 = vector.load %arg6[%c16, %c0_37] : memref<72x128xf32, #tpu.memory_space<vmem>>, vector<56x128xf32>
    %c0_38 = arith.constant 0 : index
    %c8_39 = arith.constant 8 : index
    %64 = vector.load %arg3[%c0_38, %c8_39] : memref<56x9xf32, #tpu.memory_space<vmem>>, vector<56x1xf32>
    %65 = vector.broadcast %64 : vector<56x1xf32> to vector<56x128xf32>
    %66 = arith.mulf %63, %65 : vector<56x128xf32>
    %67 = tpu.concatenate %34, %38, %42, %46, %50, %54, %58, %62, %66 in 1 : vector<56x128xf32>, vector<56x128xf32>, vector<56x128xf32>, vector<56x128xf32>, vector<56x128xf32>, vector<56x128xf32>, vector<56x128xf32>, vector<56x128xf32>, vector<56x128xf32> -> vector<56x1152xf32>
    %c0_40 = arith.constant 0 : index
    %c0_41 = arith.constant 0 : index
    %68 = vector.load %arg4[%c0_40, %c0_41] : memref<1152x32xf32, #tpu.memory_space<vmem>>, vector<1152x32xf32>
    %cst_42 = arith.constant dense<0.000000e+00> : vector<56x32xf32>
    %69 = tpu.matmul %67, %68, %cst_42 {dimension_numbers = #tpu.dot_dimension_numbers<[1], [0], [0], [1], [0, 0, 1, 1], [], []>} : vector<56x1152xf32>, vector<1152x32xf32>, vector<56x32xf32> -> vector<56x32xf32>
    %c0_43 = arith.constant 0 : index
    %c0_44 = arith.constant 0 : index
    %70 = vector.load %arg5[%c0_43, %c0_44] : memref<56x32xf32, #tpu.memory_space<vmem>>, vector<56x32xf32>
    tpu.vector_store %arg5[%c0_43, %c0_44], %69 {strides = array<i32>} : memref<56x32xf32, #tpu.memory_space<vmem>>, vector<56x32xf32>,
    return
  }
}

</mosaic_0001>

<llo_original>
// kernel: tpu_custom_call.1
$region0: #{tpu_custom_call.1}
  #allocation0 [shape = 'u32[]', space=smem, size = 0x4, offset = 0x4, fixed_abs, tag = 'smem constant byte address 0x4 - core index']
  #allocation1 [shape = 'u32[144,128]{1,0:T(1,128)}', space=vmem, size = 0x12000, scoped, tag = 'internal scratch']
  #allocation2 [shape = 'f32[72,128]{1,0:T(8,128)}', space=vmem, size = 0x9000, scoped, tag = 'scratch operand']
  %s0 = inlined_call_operand.vmem [shape: f32[56,128], index: 0, kind: input, shape index: {}]
  %s1 = inlined_call_operand.vmem [shape: f32[1,128], index: 1, kind: input, shape index: {}]
  %s2 = inlined_call_operand.vmem [shape: f32[1,128], index: 2, kind: input, shape index: {}]
  %s3 = inlined_call_operand.vmem [shape: f32[56,9], index: 3, kind: input, shape index: {}]
  %s4 = inlined_call_operand.vmem [shape: f32[1152,32], index: 4, kind: input, shape index: {}]
  %s5 = inlined_call_operand.vmem [shape: f32[56,32], index: 5, kind: output, shape index: {}]
  %s6 = sld [smem:[#allocation0]]
  $region30: #{tpu_custom_call.1} parent=0
    _
  %s8 = ssub.s32 1, %s6
  %s9 = scalar_select 0, %s8, %s6
  // Predicated region
  $region2: #{tpu_custom_call.1} parent=0 // pred_check
    _
  $region3: #{tpu_custom_call.1} parent=0 // pred_check_branch
    %11 = sbr.rel (0) target = $region5
  $region4: #{tpu_custom_call.1} parent=0 // pred_region
    _
  $region5: #{tpu_custom_call.1} parent=0 // pred_fallthru
    _
  // Predicated region
  $region6: #{tpu_custom_call.1} parent=0 // pred_check
    _
  $region7: #{tpu_custom_call.1} parent=0 // pred_check_branch
    %13 = sbr.rel (0) target = $region9
  $region8: #{tpu_custom_call.1} parent=0 // pred_region
    _
  $region9: #{tpu_custom_call.1} parent=0 // pred_fallthru
    _
  // Predicated region
  $region10: #{tpu_custom_call.1} parent=0 // pred_check
    _
  $region11: #{tpu_custom_call.1} parent=0 // pred_check_branch
    %15 = sbr.rel (0) target = $region13
  $region12: #{tpu_custom_call.1} parent=0 // pred_region
    _
  $region13: #{tpu_custom_call.1} parent=0 // pred_fallthru
    _
  // Predicated region
  $region14: #{tpu_custom_call.1} parent=0 // pred_check
    _
  $region15: #{tpu_custom_call.1} parent=0 // pred_check_branch
    %17 = sbr.rel (0) target = $region17
  $region16: #{tpu_custom_call.1} parent=0 // pred_region
    _
  $region17: #{tpu_custom_call.1} parent=0 // pred_fallthru
    _
  // Predicated region
  $region18: #{tpu_custom_call.1} parent=0 // pred_check
    _
  $region19: #{tpu_custom_call.1} parent=0 // pred_check_branch
    %19 = sbr.rel (0) target = $region21
  $region20: #{tpu_custom_call.1} parent=0 // pred_region
    _
  $region21: #{tpu_custom_call.1} parent=0 // pred_fallthru
    _
  %v20 = vld [vmem:[%s0] sm:$0xff]
  %v21 = vld [vmem:[%s0 + $0x8] sm:$0xff]
  %v22 = vld [vmem:[%s0 + $0x10] sm:$0xff]
  %v23 = vld [vmem:[%s0 + $0x18] sm:$0xff]
  %v24 = vld [vmem:[%s0 + $0x20] sm:$0xff]
  %v25 = vld [vmem:[%s0 + $0x28] sm:$0xff]
  %v26 = vld [vmem:[%s0 + $0x30] sm:$0xff]
  %v27 = vadd.f32 %v20, %v21
  %v28 = vadd.f32 %v27, %v22
  %v29 = vadd.f32 %v28, %v23
  %v30 = vadd.f32 %v29, %v24
  %v31 = vadd.f32 %v30, %v25
  %v32 = vadd.f32 %v31, %v26
  %v33 = vrot.slane %v32, 4
  %v34 = vadd.f32 %v32, %v33
  %v35 = vrot.slane %v34, 2
  %v36 = vadd.f32 %v34, %v35
  %v37 = vrot.slane %v36, 1
  %v38 = vadd.f32 %v36, %v37
  %v39 = vmul.f32 %v20, %v20
  %v40 = vmul.f32 %v21, %v21
  %v41 = vmul.f32 %v22, %v22
  %v42 = vmul.f32 %v23, %v23
  %v43 = vmul.f32 %v24, %v24
  %v44 = vmul.f32 %v25, %v25
  %v45 = vmul.f32 %v26, %v26
  %v46 = vadd.f32 %v39, %v40
  %v47 = vadd.f32 %v46, %v41
  %v48 = vadd.f32 %v47, %v42
  %v49 = vadd.f32 %v48, %v43
  %v50 = vadd.f32 %v49, %v44
  %v51 = vadd.f32 %v50, %v45
  %v52 = vrot.slane %v51, 4
  %v53 = vadd.f32 %v51, %v52
  %v54 = vrot.slane %v53, 2
  %v55 = vadd.f32 %v53, %v54
  %v56 = vrot.slane %v55, 1
  %v57 = vadd.f32 %v55, %v56
  %v58 = vmul.f32 %v38, 0.020408163
  %v59 = vmul.f32 %v57, 0.020408163
  %v60 = vmul.f32 %v58, %v58
  %v61 = vsub.f32 %v59, %v60
  %v62 = vmax.f32 %v61, 0.0
  %v63 = vadd.f32 %v62, 1e-05
  %v64 = vrsqrt.pop %v63
  %v65 = vld [vmem:[%s1] sm:$0x1]
  %v66 = vmul.f32 %v64, %v65
  %v67 = vld [vmem:[%s2] sm:$0x1]
  %v68 = vmul.f32 %v58, %v66
  %v69 = vsub.f32 %v67, %v68
  %v70 = vlaneseq
  %v71 = vshrl.u32 %v70, 7
  %v72 = vsub.s32 0, %v71
  %v73 = vrot.slane %v66, %v72
  %v74 = vmul.f32 %v20, %v73
  %v75 = vmul.f32 %v21, %v73
  %v76 = vmul.f32 %v22, %v73
  %v77 = vmul.f32 %v23, %v73
  %v78 = vmul.f32 %v24, %v73
  %v79 = vmul.f32 %v25, %v73
  %v80 = vmul.f32 %v26, %v73
  %v82 = vlaneseq
  %v83 = vshrl.u32 %v82, 7
  %v84 = vsub.s32 0, %v83
  %v85 = vrot.slane %v69, %v84
  %v87 = vadd.f32 %v74, %v85
  %v88 = vadd.f32 %v75, %v85
  %v89 = vadd.f32 %v76, %v85
  %v90 = vadd.f32 %v77, %v85
  %v91 = vadd.f32 %v78, %v85
  %v92 = vadd.f32 %v79, %v85
  %v93 = vadd.f32 %v80, %v85
  %v94 = vmax.f32 %v87, 0.0
  %v95 = vmax.f32 %v88, 0.0
  %v96 = vmax.f32 %v89, 0.0
  %v97 = vmax.f32 %v90, 0.0
  %v98 = vmax.f32 %v91, 0.0
  %v99 = vmax.f32 %v92, 0.0
  %v100 = vmax.f32 %v93, 0.0
  %101 = vst [vmem:[#allocation2] sm:$0xff] 0.0
  %102 = vst [vmem:[#allocation2 + $0x8] sm:$0xff] 0.0
  %103 = vst [vmem:[#allocation2 + $0x10] sm:$0xff] 0.0
  %104 = vst [vmem:[#allocation2 + $0x18] sm:$0xff] 0.0
  %105 = vst [vmem:[#allocation2 + $0x20] sm:$0xff] 0.0
  %106 = vst [vmem:[#allocation2 + $0x28] sm:$0xff] 0.0
  %107 = vst [vmem:[#allocation2 + $0x30] sm:$0xff] 0.0
  %108 = vst [vmem:[#allocation2 + $0x38] sm:$0xff] 0.0
  %109 = vst [vmem:[#allocation2 + $0x40] sm:$0xff] 0.0
  %110 = vst [vmem:[#allocation2 + $0x8] sm:$0xff] %v94
  %111 = vst [vmem:[#allocation2 + $0x10] sm:$0xff] %v95
  %112 = vst [vmem:[#allocation2 + $0x18] sm:$0xff] %v96
  %113 = vst [vmem:[#allocation2 + $0x20] sm:$0xff] %v97
  %114 = vst [vmem:[#allocation2 + $0x28] sm:$0xff] %v98
  %115 = vst [vmem:[#allocation2 + $0x30] sm:$0xff] %v99
  %116 = vst [vmem:[#allocation2 + $0x38] sm:$0xff] %v100
  %v117 = vld [vmem:[#allocation2] sm:$0xff]
  %v118 = vld [vmem:[#allocation2 + $0x8] sm:$0xff]
  %v119 = vld [vmem:[#allocation2 + $0x10] sm:$0xff]
  %v120 = vld [vmem:[#allocation2 + $0x18] sm:$0xff]
  %v121 = vld [vmem:[#allocation2 + $0x20] sm:$0xff]
  %v122 = vld [vmem:[#allocation2 + $0x28] sm:$0xff]
  %v123 = vld [vmem:[#allocation2 + $0x30] sm:$0xff]
  %v124 = vld [vmem:[%s3] sm:$0xff]
  %v125 = vld [vmem:[%s3 + $0x8] sm:$0xff]
  %v126 = vld [vmem:[%s3 + $0x10] sm:$0xff]
  %v127 = vld [vmem:[%s3 + $0x18] sm:$0xff]
  %v128 = vld [vmem:[%s3 + $0x20] sm:$0xff]
  %v129 = vld [vmem:[%s3 + $0x28] sm:$0xff]
  %v130 = vld [vmem:[%s3 + $0x30] sm:$0xff]
  %132 = vset.pattern.permute.xlu0 0
  %133 = vperm.xlu0 %132, %v124
  %v134 = vpop.permute.xlu0 %133
  %137 = vset.pattern.permute.xlu0 0
  %138 = vperm.xlu0 %137, %v125
  %v139 = vpop.permute.xlu0 %138
  %142 = vset.pattern.permute.xlu0 0
  %143 = vperm.xlu0 %142, %v126
  %v144 = vpop.permute.xlu0 %143
  %147 = vset.pattern.permute.xlu0 0
  %148 = vperm.xlu0 %147, %v127
  %v149 = vpop.permute.xlu0 %148
  %152 = vset.pattern.permute.xlu0 0
  %153 = vperm.xlu0 %152, %v128
  %v154 = vpop.permute.xlu0 %153
  %157 = vset.pattern.permute.xlu0 0
  %158 = vperm.xlu0 %157, %v129
  %v159 = vpop.permute.xlu0 %158
  %162 = vset.pattern.permute.xlu0 0
  %163 = vperm.xlu0 %162, %v130
  %v164 = vpop.permute.xlu0 %163
  %v166 = vmul.f32 %v117, %v134
  %v167 = vmul.f32 %v118, %v139
  %v168 = vmul.f32 %v119, %v144
  %v169 = vmul.f32 %v120, %v149
  %v170 = vmul.f32 %v121, %v154
  %v171 = vmul.f32 %v122, %v159
  %v172 = vmul.f32 %v123, %v164
  %v173 = vld [vmem:[#allocation2 + $0x1] sm:$0xff]
  %v174 = vld [vmem:[#allocation2 + $0x9] sm:$0xff]
  %v175 = vld [vmem:[#allocation2 + $0x11] sm:$0xff]
  %v176 = vld [vmem:[#allocation2 + $0x19] sm:$0xff]
  %v177 = vld [vmem:[#allocation2 + $0x21] sm:$0xff]
  %v178 = vld [vmem:[#allocation2 + $0x29] sm:$0xff]
  %v179 = vld [vmem:[#allocation2 + $0x31] sm:$0xff]
  %180 = vset.pattern.permute.xlu0 1
  %181 = vperm.xlu0 %180, %v124
  %v182 = vpop.permute.xlu0 %181
  %184 = vset.pattern.permute.xlu0 1
  %185 = vperm.xlu0 %184, %v125
  %v186 = vpop.permute.xlu0 %185
  %188 = vset.pattern.permute.xlu0 1
  %189 = vperm.xlu0 %188, %v126
  %v190 = vpop.permute.xlu0 %189
  %192 = vset.pattern.permute.xlu0 1
  %193 = vperm.xlu0 %192, %v127
  %v194 = vpop.permute.xlu0 %193
  %196 = vset.pattern.permute.xlu0 1
  %197 = vperm.xlu0 %196, %v128
  %v198 = vpop.permute.xlu0 %197
  %200 = vset.pattern.permute.xlu0 1
  %201 = vperm.xlu0 %200, %v129
  %v202 = vpop.permute.xlu0 %201
  %204 = vset.pattern.permute.xlu0 1
  %205 = vperm.xlu0 %204, %v130
  %v206 = vpop.permute.xlu0 %205
  %v208 = vmul.f32 %v173, %v182
  %v209 = vmul.f32 %v174, %v186
  %v210 = vmul.f32 %v175, %v190
  %v211 = vmul.f32 %v176, %v194
  %v212 = vmul.f32 %v177, %v198
  %v213 = vmul.f32 %v178, %v202
  %v214 = vmul.f32 %v179, %v206
  %v215 = vld [vmem:[#allocation2 + $0x2] sm:$0xff]
  %v216 = vld [vmem:[#allocation2 + $0xa] sm:$0xff]
  %v217 = vld [vmem:[#allocation2 + $0x12] sm:$0xff]
  %v218 = vld [vmem:[#allocation2 + $0x1a] sm:$0xff]
  %v219 = vld [vmem:[#allocation2 + $0x22] sm:$0xff]
  %v220 = vld [vmem:[#allocation2 + $0x2a] sm:$0xff]
  %v221 = vld [vmem:[#allocation2 + $0x32] sm:$0xff]
  %222 = vset.pattern.permute.xlu0 2
  %223 = vperm.xlu0 %222, %v124
  %v224 = vpop.permute.xlu0 %223
  %226 = vset.pattern.permute.xlu0 2
  %227 = vperm.xlu0 %226, %v125
  %v228 = vpop.permute.xlu0 %227
  %230 = vset.pattern.permute.xlu0 2
  %231 = vperm.xlu0 %230, %v126
  %v232 = vpop.permute.xlu0 %231
  %234 = vset.pattern.permute.xlu0 2
  %235 = vperm.xlu0 %234, %v127
  %v236 = vpop.permute.xlu0 %235
  %238 = vset.pattern.permute.xlu0 2
  %239 = vperm.xlu0 %238, %v128
  %v240 = vpop.permute.xlu0 %239
  %242 = vset.pattern.permute.xlu0 2
  %243 = vperm.xlu0 %242, %v129
  %v244 = vpop.permute.xlu0 %243
  %246 = vset.pattern.permute.xlu0 2
  %247 = vperm.xlu0 %246, %v130
  %v248 = vpop.permute.xlu0 %247
  %v250 = vmul.f32 %v215, %v224
  %v251 = vmul.f32 %v216, %v228
  %v252 = vmul.f32 %v217, %v232
  %v253 = vmul.f32 %v218, %v236
  %v254 = vmul.f32 %v219, %v240
  %v255 = vmul.f32 %v220, %v244
  %v256 = vmul.f32 %v221, %v248
  %v257 = vld [vmem:[#allocation2 + $0x7] sm:$0xff]
  %v258 = vld [vmem:[#allocation2 + $0xf] sm:$0xff]
  %v259 = vld [vmem:[#allocation2 + $0x17] sm:$0xff]
  %v260 = vld [vmem:[#allocation2 + $0x1f] sm:$0xff]
  %v261 = vld [vmem:[#allocation2 + $0x27] sm:$0xff]
  %v262 = vld [vmem:[#allocation2 + $0x2f] sm:$0xff]
  %v263 = vld [vmem:[#allocation2 + $0x37] sm:$0xff]
  %264 = vset.pattern.permute.xlu0 3
  %265 = vperm.xlu0 %264, %v124
  %v266 = vpop.permute.xlu0 %265
  %268 = vset.pattern.permute.xlu0 3
  %269 = vperm.xlu0 %268, %v125
  %v270 = vpop.permute.xlu0 %269
  %272 = vset.pattern.permute.xlu0 3
  %273 = vperm.xlu0 %272, %v126
  %v274 = vpop.permute.xlu0 %273
  %276 = vset.pattern.permute.xlu0 3
  %277 = vperm.xlu0 %276, %v127
  %v278 = vpop.permute.xlu0 %277
  %280 = vset.pattern.permute.xlu0 3
  %281 = vperm.xlu0 %280, %v128
  %v282 = vpop.permute.xlu0 %281
  %284 = vset.pattern.permute.xlu0 3
  %285 = vperm.xlu0 %284, %v129
  %v286 = vpop.permute.xlu0 %285
  %288 = vset.pattern.permute.xlu0 3
  %289 = vperm.xlu0 %288, %v130
  %v290 = vpop.permute.xlu0 %289
  %v292 = vmul.f32 %v257, %v266
  %v293 = vmul.f32 %v258, %v270
  %v294 = vmul.f32 %v259, %v274
  %v295 = vmul.f32 %v260, %v278
  %v296 = vmul.f32 %v261, %v282
  %v297 = vmul.f32 %v262, %v286
  %v298 = vmul.f32 %v263, %v290
  %v299 = vld [vmem:[#allocation2 + $0x8] sm:$0xff]
  %v300 = vld [vmem:[#allocation2 + $0x10] sm:$0xff]
  %v301 = vld [vmem:[#allocation2 + $0x18] sm:$0xff]
  %v302 = vld [vmem:[#allocation2 + $0x20] sm:$0xff]
  %v303 = vld [vmem:[#allocation2 + $0x28] sm:$0xff]
  %v304 = vld [vmem:[#allocation2 + $0x30] sm:$0xff]
  %v305 = vld [vmem:[#allocation2 + $0x38] sm:$0xff]
  %306 = vset.pattern.permute.xlu0 4
  %307 = vperm.xlu0 %306, %v124
  %v308 = vpop.permute.xlu0 %307
  %310 = vset.pattern.permute.xlu0 4
  %311 = vperm.xlu0 %310, %v125
  %v312 = vpop.permute.xlu0 %311
  %314 = vset.pattern.permute.xlu0 4
  %315 = vperm.xlu0 %314, %v126
  %v316 = vpop.permute.xlu0 %315
  %318 = vset.pattern.permute.xlu0 4
  %319 = vperm.xlu0 %318, %v127
  %v320 = vpop.permute.xlu0 %319
  %322 = vset.pattern.permute.xlu0 4
  %323 = vperm.xlu0 %322, %v128
  %v324 = vpop.permute.xlu0 %323
  %326 = vset.pattern.permute.xlu0 4
  %327 = vperm.xlu0 %326, %v129
  %v328 = vpop.permute.xlu0 %327
  %330 = vset.pattern.permute.xlu0 4
  %331 = vperm.xlu0 %330, %v130
  %v332 = vpop.permute.xlu0 %331
  %v334 = vmul.f32 %v299, %v308
  %v335 = vmul.f32 %v300, %v312
  %v336 = vmul.f32 %v301, %v316
  %v337 = vmul.f32 %v302, %v320
  %v338 = vmul.f32 %v303, %v324
  %v339 = vmul.f32 %v304, %v328
  %v340 = vmul.f32 %v305, %v332
  %v341 = vld [vmem:[#allocation2 + $0x9] sm:$0xff]
  %v342 = vld [vmem:[#allocation2 + $0x11] sm:$0xff]
  %v343 = vld [vmem:[#allocation2 + $0x19] sm:$0xff]
  %v344 = vld [vmem:[#allocation2 + $0x21] sm:$0xff]
  %v345 = vld [vmem:[#allocation2 + $0x29] sm:$0xff]
  %v346 = vld [vmem:[#allocation2 + $0x31] sm:$0xff]
  %v347 = vld [vmem:[#allocation2 + $0x39] sm:$0xff]
  %348 = vset.pattern.permute.xlu0 5
  %349 = vperm.xlu0 %348, %v124
  %v350 = vpop.permute.xlu0 %349
  %352 = vset.pattern.permute.xlu0 5
  %353 = vperm.xlu0 %352, %v125
  %v354 = vpop.permute.xlu0 %353
  %356 = vset.pattern.permute.xlu0 5
  %357 = vperm.xlu0 %356, %v126
  %v358 = vpop.permute.xlu0 %357
  %360 = vset.pattern.permute.xlu0 5
  %361 = vperm.xlu0 %360, %v127
  %v362 = vpop.permute.xlu0 %361
  %364 = vset.pattern.permute.xlu0 5
  %365 = vperm.xlu0 %364, %v128
  %v366 = vpop.permute.xlu0 %365
  %368 = vset.pattern.permute.xlu0 5
  %369 = vperm.xlu0 %368, %v129
  %v370 = vpop.permute.xlu0 %369
  %372 = vset.pattern.permute.xlu0 5
  %373 = vperm.xlu0 %372, %v130
  %v374 = vpop.permute.xlu0 %373
  %v376 = vmul.f32 %v341, %v350
  %v377 = vmul.f32 %v342, %v354
  %v378 = vmul.f32 %v343, %v358
  %v379 = vmul.f32 %v344, %v362
  %v380 = vmul.f32 %v345, %v366
  %v381 = vmul.f32 %v346, %v370
  %v382 = vmul.f32 %v347, %v374
  %v383 = vld [vmem:[#allocation2 + $0xe] sm:$0xff]
  %v384 = vld [vmem:[#allocation2 + $0x16] sm:$0xff]
  %v385 = vld [vmem:[#allocation2 + $0x1e] sm:$0xff]
  %v386 = vld [vmem:[#allocation2 + $0x26] sm:$0xff]
  %v387 = vld [vmem:[#allocation2 + $0x2e] sm:$0xff]
  %v388 = vld [vmem:[#allocation2 + $0x36] sm:$0xff]
  %v389 = vld [vmem:[#allocation2 + $0x3e] sm:$0xff]
  %390 = vset.pattern.permute.xlu0 6
  %391 = vperm.xlu0 %390, %v124
  %v392 = vpop.permute.xlu0 %391
  %394 = vset.pattern.permute.xlu0 6
  %395 = vperm.xlu0 %394, %v125
  %v396 = vpop.permute.xlu0 %395
  %398 = vset.pattern.permute.xlu0 6
  %399 = vperm.xlu0 %398, %v126
  %v400 = vpop.permute.xlu0 %399
  %402 = vset.pattern.permute.xlu0 6
  %403 = vperm.xlu0 %402, %v127
  %v404 = vpop.permute.xlu0 %403
  %406 = vset.pattern.permute.xlu0 6
  %407 = vperm.xlu0 %406, %v128
  %v408 = vpop.permute.xlu0 %407
  %410 = vset.pattern.permute.xlu0 6
  %411 = vperm.xlu0 %410, %v129
  %v412 = vpop.permute.xlu0 %411
  %414 = vset.pattern.permute.xlu0 6
  %415 = vperm.xlu0 %414, %v130
  %v416 = vpop.permute.xlu0 %415
  %v418 = vmul.f32 %v383, %v392
  %v419 = vmul.f32 %v384, %v396
  %v420 = vmul.f32 %v385, %v400
  %v421 = vmul.f32 %v386, %v404
  %v422 = vmul.f32 %v387, %v408
  %v423 = vmul.f32 %v388, %v412
  %v424 = vmul.f32 %v389, %v416
  %v425 = vld [vmem:[#allocation2 + $0xf] sm:$0xff]
  %v426 = vld [vmem:[#allocation2 + $0x17] sm:$0xff]
  %v427 = vld [vmem:[#allocation2 + $0x1f] sm:$0xff]
  %v428 = vld [vmem:[#allocation2 + $0x27] sm:$0xff]
  %v429 = vld [vmem:[#allocation2 + $0x2f] sm:$0xff]
  %v430 = vld [vmem:[#allocation2 + $0x37] sm:$0xff]
  %v431 = vld [vmem:[#allocation2 + $0x3f] sm:$0xff]
  %432 = vset.pattern.permute.xlu0 7
  %433 = vperm.xlu0 %432, %v124
  %v434 = vpop.permute.xlu0 %433
  %436 = vset.pattern.permute.xlu0 7
  %437 = vperm.xlu0 %436, %v125
  %v438 = vpop.permute.xlu0 %437
  %440 = vset.pattern.permute.xlu0 7
  %441 = vperm.xlu0 %440, %v126
  %v442 = vpop.permute.xlu0 %441
  %444 = vset.pattern.permute.xlu0 7
  %445 = vperm.xlu0 %444, %v127
  %v446 = vpop.permute.xlu0 %445
  %448 = vset.pattern.permute.xlu0 7
  %449 = vperm.xlu0 %448, %v128
  %v450 = vpop.permute.xlu0 %449
  %452 = vset.pattern.permute.xlu0 7
  %453 = vperm.xlu0 %452, %v129
  %v454 = vpop.permute.xlu0 %453
  %456 = vset.pattern.permute.xlu0 7
  %457 = vperm.xlu0 %456, %v130
  %v458 = vpop.permute.xlu0 %457
  %v460 = vmul.f32 %v425, %v434
  %v461 = vmul.f32 %v426, %v438
  %v462 = vmul.f32 %v427, %v442
  %v463 = vmul.f32 %v428, %v446
  %v464 = vmul.f32 %v429, %v450
  %v465 = vmul.f32 %v430, %v454
  %v466 = vmul.f32 %v431, %v458
  %v467 = vld [vmem:[#allocation2 + $0x10] sm:$0xff]
  %v468 = vld [vmem:[#allocation2 + $0x18] sm:$0xff]
  %v469 = vld [vmem:[#allocation2 + $0x20] sm:$0xff]
  %v470 = vld [vmem:[#allocation2 + $0x28] sm:$0xff]
  %v471 = vld [vmem:[#allocation2 + $0x30] sm:$0xff]
  %v472 = vld [vmem:[#allocation2 + $0x38] sm:$0xff]
  %v473 = vld [vmem:[#allocation2 + $0x40] sm:$0xff]
  %474 = vset.pattern.permute.xlu0 8
  %475 = vperm.xlu0 %474, %v124
  %v476 = vpop.permute.xlu0 %475
  %478 = vset.pattern.permute.xlu0 8
  %479 = vperm.xlu0 %478, %v125
  %v480 = vpop.permute.xlu0 %479
  %482 = vset.pattern.permute.xlu0 8
  %483 = vperm.xlu0 %482, %v126
  %v484 = vpop.permute.xlu0 %483
  %486 = vset.pattern.permute.xlu0 8
  %487 = vperm.xlu0 %486, %v127
  %v488 = vpop.permute.xlu0 %487
  %490 = vset.pattern.permute.xlu0 8
  %491 = vperm.xlu0 %490, %v128
  %v492 = vpop.permute.xlu0 %491
  %494 = vset.pattern.permute.xlu0 8
  %495 = vperm.xlu0 %494, %v129
  %v496 = vpop.permute.xlu0 %495
  %498 = vset.pattern.permute.xlu0 8
  %499 = vperm.xlu0 %498, %v130
  %v500 = vpop.permute.xlu0 %499
  %v502 = vmul.f32 %v467, %v476
  %v503 = vmul.f32 %v468, %v480
  %v504 = vmul.f32 %v469, %v484
  %v505 = vmul.f32 %v470, %v488
  %v506 = vmul.f32 %v471, %v492
  %v507 = vmul.f32 %v472, %v496
  %v508 = vmul.f32 %v473, %v500
  %v509 = vld [vmem:[%s4] sm:$0xff]
  %v510 = vld [vmem:[%s4 + $0x8] sm:$0xff]
  %v511 = vld [vmem:[%s4 + $0x10] sm:$0xff]
  %v512 = vld [vmem:[%s4 + $0x18] sm:$0xff]
  %v513 = vld [vmem:[%s4 + $0x20] sm:$0xff]
  %v514 = vld [vmem:[%s4 + $0x28] sm:$0xff]
  %v515 = vld [vmem:[%s4 + $0x30] sm:$0xff]
  %v516 = vld [vmem:[%s4 + $0x38] sm:$0xff]
  %v517 = vld [vmem:[%s4 + $0x40] sm:$0xff]
  %v518 = vld [vmem:[%s4 + $0x48] sm:$0xff]
  %v519 = vld [vmem:[%s4 + $0x50] sm:$0xff]
  %v520 = vld [vmem:[%s4 + $0x58] sm:$0xff]
  %v521 = vld [vmem:[%s4 + $0x60] sm:$0xff]
  %v522 = vld [vmem:[%s4 + $0x68] sm:$0xff]
  %v523 = vld [vmem:[%s4 + $0x70] sm:$0xff]
  %v524 = vld [vmem:[%s4 + $0x78] sm:$0xff]
  %v525 = vld [vmem:[%s4 + $0x80] sm:$0xff]
  %v526 = vld [vmem:[%s4 + $0x88] sm:$0xff]
  %v527 = vld [vmem:[%s4 + $0x90] sm:$0xff]
  %v528 = vld [vmem:[%s4 + $0x98] sm:$0xff]
  %v529 = vld [vmem:[%s4 + $0xa0] sm:$0xff]
  %v530 = vld [vmem:[%s4 + $0xa8] sm:$0xff]
  %v531 = vld [vmem:[%s4 + $0xb0] sm:$0xff]
  %v532 = vld [vmem:[%s4 + $0xb8] sm:$0xff]
  %v533 = vld [vmem:[%s4 + $0xc0] sm:$0xff]
  %v534 = vld [vmem:[%s4 + $0xc8] sm:$0xff]
  %v535 = vld [vmem:[%s4 + $0xd0] sm:$0xff]
  %v536 = vld [vmem:[%s4 + $0xd8] sm:$0xff]
  %v537 = vld [vmem:[%s4 + $0xe0] sm:$0xff]
  %v538 = vld [vmem:[%s4 + $0xe8] sm:$0xff]
  %v539 = vld [vmem:[%s4 + $0xf0] sm:$0xff]
  %v540 = vld [vmem:[%s4 + $0xf8] sm:$0xff]
  %v541 = vld [vmem:[%s4 + $0x100] sm:$0xff]
  %v542 = vld [vmem:[%s4 + $0x108] sm:$0xff]
  %v543 = vld [vmem:[%s4 + $0x110] sm:$0xff]
  %v544 = vld [vmem:[%s4 + $0x118] sm:$0xff]
  %v545 = vld [vmem:[%s4 + $0x120] sm:$0xff]
  %v546 = vld [vmem:[%s4 + $0x128] sm:$0xff]
  %v547 = vld [vmem:[%s4 + $0x130] sm:$0xff]
  %v548 = vld [vmem:[%s4 + $0x138] sm:$0xff]
  %v549 = vld [vmem:[%s4 + $0x140] sm:$0xff]
  %v550 = vld [vmem:[%s4 + $0x148] sm:$0xff]
  %v551 = vld [vmem:[%s4 + $0x150] sm:$0xff]
  %v552 = vld [vmem:[%s4 + $0x158] sm:$0xff]
  %v553 = vld [vmem:[%s4 + $0x160] sm:$0xff]
  %v554 = vld [vmem:[%s4 + $0x168] sm:$0xff]
  %v555 = vld [vmem:[%s4 + $0x170] sm:$0xff]
  %v556 = vld [vmem:[%s4 + $0x178] sm:$0xff]
  %v557 = vld [vmem:[%s4 + $0x180] sm:$0xff]
  %v558 = vld [vmem:[%s4 + $0x188] sm:$0xff]
  %v559 = vld [vmem:[%s4 + $0x190] sm:$0xff]
  %v560 = vld [vmem:[%s4 + $0x198] sm:$0xff]
  %v561 = vld [vmem:[%s4 + $0x1a0] sm:$0xff]
  %v562 = vld [vmem:[%s4 + $0x1a8] sm:$0xff]
  %v563 = vld [vmem:[%s4 + $0x1b0] sm:$0xff]
  %v564 = vld [vmem:[%s4 + $0x1b8] sm:$0xff]
  %v565 = vld [vmem:[%s4 + $0x1c0] sm:$0xff]
  %v566 = vld [vmem:[%s4 + $0x1c8] sm:$0xff]
  %v567 = vld [vmem:[%s4 + $0x1d0] sm:$0xff]
  %v568 = vld [vmem:[%s4 + $0x1d8] sm:$0xff]
  %v569 = vld [vmem:[%s4 + $0x1e0] sm:$0xff]
  %v570 = vld [vmem:[%s4 + $0x1e8] sm:$0xff]
  %v571 = vld [vmem:[%s4 + $0x1f0] sm:$0xff]
  %v572 = vld [vmem:[%s4 + $0x1f8] sm:$0xff]
  %v573 = vld [vmem:[%s4 + $0x200] sm:$0xff]
  %v574 = vld [vmem:[%s4 + $0x208] sm:$0xff]
  %v575 = vld [vmem:[%s4 + $0x210] sm:$0xff]
  %v576 = vld [vmem:[%s4 + $0x218] sm:$0xff]
  %v577 = vld [vmem:[%s4 + $0x220] sm:$0xff]
  %v578 = vld [vmem:[%s4 + $0x228] sm:$0xff]
  %v579 = vld [vmem:[%s4 + $0x230] sm:$0xff]
  %v580 = vld [vmem:[%s4 + $0x238] sm:$0xff]
  %v581 = vld [vmem:[%s4 + $0x240] sm:$0xff]
  %v582 = vld [vmem:[%s4 + $0x248] sm:$0xff]
  %v583 = vld [vmem:[%s4 + $0x250] sm:$0xff]
  %v584 = vld [vmem:[%s4 + $0x258] sm:$0xff]
  %v585 = vld [vmem:[%s4 + $0x260] sm:$0xff]
  %v586 = vld [vmem:[%s4 + $0x268] sm:$0xff]
  %v587 = vld [vmem:[%s4 + $0x270] sm:$0xff]
  %v588 = vld [vmem:[%s4 + $0x278] sm:$0xff]
  %v589 = vld [vmem:[%s4 + $0x280] sm:$0xff]
  %v590 = vld [vmem:[%s4 + $0x288] sm:$0xff]
  %v591 = vld [vmem:[%s4 + $0x290] sm:$0xff]
  %v592 = vld [vmem:[%s4 + $0x298] sm:$0xff]
  %v593 = vld [vmem:[%s4 + $0x2a0] sm:$0xff]
  %v594 = vld [vmem:[%s4 + $0x2a8] sm:$0xff]
  %v595 = vld [vmem:[%s4 + $0x2b0] sm:$0xff]
  %v596 = vld [vmem:[%s4 + $0x2b8] sm:$0xff]
  %v597 = vld [vmem:[%s4 + $0x2c0] sm:$0xff]
  %v598 = vld [vmem:[%s4 + $0x2c8] sm:$0xff]
  %v599 = vld [vmem:[%s4 + $0x2d0] sm:$0xff]
  %v600 = vld [vmem:[%s4 + $0x2d8] sm:$0xff]
  %v601 = vld [vmem:[%s4 + $0x2e0] sm:$0xff]
  %v602 = vld [vmem:[%s4 + $0x2e8] sm:$0xff]
  %v603 = vld [vmem:[%s4 + $0x2f0] sm:$0xff]
  %v604 = vld [vmem:[%s4 + $0x2f8] sm:$0xff]
  %v605 = vld [vmem:[%s4 + $0x300] sm:$0xff]
  %v606 = vld [vmem:[%s4 + $0x308] sm:$0xff]
  %v607 = vld [vmem:[%s4 + $0x310] sm:$0xff]
  %v608 = vld [vmem:[%s4 + $0x318] sm:$0xff]
  %v609 = vld [vmem:[%s4 + $0x320] sm:$0xff]
  %v610 = vld [vmem:[%s4 + $0x328] sm:$0xff]
  %v611 = vld [vmem:[%s4 + $0x330] sm:$0xff]
  %v612 = vld [vmem:[%s4 + $0x338] sm:$0xff]
  %v613 = vld [vmem:[%s4 + $0x340] sm:$0xff]
  %v614 = vld [vmem:[%s4 + $0x348] sm:$0xff]
  %v615 = vld [vmem:[%s4 + $0x350] sm:$0xff]
  %v616 = vld [vmem:[%s4 + $0x358] sm:$0xff]
  %v617 = vld [vmem:[%s4 + $0x360] sm:$0xff]
  %v618 = vld [vmem:[%s4 + $0x368] sm:$0xff]
  %v619 = vld [vmem:[%s4 + $0x370] sm:$0xff]
  %v620 = vld [vmem:[%s4 + $0x378] sm:$0xff]
  %v621 = vld [vmem:[%s4 + $0x380] sm:$0xff]
  %v622 = vld [vmem:[%s4 + $0x388] sm:$0xff]
  %v623 = vld [vmem:[%s4 + $0x390] sm:$0xff]
  %v624 = vld [vmem:[%s4 + $0x398] sm:$0xff]
  %v625 = vld [vmem:[%s4 + $0x3a0] sm:$0xff]
  %v626 = vld [vmem:[%s4 + $0x3a8] sm:$0xff]
  %v627 = vld [vmem:[%s4 + $0x3b0] sm:$0xff]
  %v628 = vld [vmem:[%s4 + $0x3b8] sm:$0xff]
  %v629 = vld [vmem:[%s4 + $0x3c0] sm:$0xff]
  %v630 = vld [vmem:[%s4 + $0x3c8] sm:$0xff]
  %v631 = vld [vmem:[%s4 + $0x3d0] sm:$0xff]
  %v632 = vld [vmem:[%s4 + $0x3d8] sm:$0xff]
  %v633 = vld [vmem:[%s4 + $0x3e0] sm:$0xff]
  %v634 = vld [vmem:[%s4 + $0x3e8] sm:$0xff]
  %v635 = vld [vmem:[%s4 + $0x3f0] sm:$0xff]
  %v636 = vld [vmem:[%s4 + $0x3f8] sm:$0xff]
  %v637 = vld [vmem:[%s4 + $0x400] sm:$0xff]
  %v638 = vld [vmem:[%s4 + $0x408] sm:$0xff]
  %v639 = vld [vmem:[%s4 + $0x410] sm:$0xff]
  %v640 = vld [vmem:[%s4 + $0x418] sm:$0xff]
  %v641 = vld [vmem:[%s4 + $0x420] sm:$0xff]
  %v642 = vld [vmem:[%s4 + $0x428] sm:$0xff]
  %v643 = vld [vmem:[%s4 + $0x430] sm:$0xff]
  %v644 = vld [vmem:[%s4 + $0x438] sm:$0xff]
  %v645 = vld [vmem:[%s4 + $0x440] sm:$0xff]
  %v646 = vld [vmem:[%s4 + $0x448] sm:$0xff]
  %v647 = vld [vmem:[%s4 + $0x450] sm:$0xff]
  %v648 = vld [vmem:[%s4 + $0x458] sm:$0xff]
  %v649 = vld [vmem:[%s4 + $0x460] sm:$0xff]
  %v650 = vld [vmem:[%s4 + $0x468] sm:$0xff]
  %v651 = vld [vmem:[%s4 + $0x470] sm:$0xff]
  %v652 = vld [vmem:[%s4 + $0x478] sm:$0xff]
  %653 = vmatprep.subr.mxu0 0.0
  %654 = vmatpush1.msra.mxu0 %v524
  %655 = vmatprep.subr.mxu0 0.0
  %656 = vmatpush1.msra.mxu0 %v523
  %657 = vmatprep.subr.mxu0 0.0
  %658 = vmatpush1.msra.mxu0 %v522
  %659 = vmatprep.subr.mxu0 0.0
  %660 = vmatpush1.msra.mxu0 %v521
  %661 = vmatprep.subr.mxu0 0.0
  %662 = vmatpush1.msra.mxu0 %v520
  %663 = vmatprep.subr.mxu0 0.0
  %664 = vmatpush1.msra.mxu0 %v519
  %665 = vmatprep.subr.mxu0 0.0
  %666 = vmatpush1.msra.mxu0 %v518
  %667 = vmatprep.subr.mxu0 0.0
  %668 = vmatpush1.msra.mxu0 %v517
  %669 = vmatprep.subr.mxu0 0.0
  %670 = vmatpush1.msra.mxu0 %v516
  %671 = vmatprep.subr.mxu0 0.0
  %672 = vmatpush1.msra.mxu0 %v515
  %673 = vmatprep.subr.mxu0 0.0
  %674 = vmatpush1.msra.mxu0 %v514
  %675 = vmatprep.subr.mxu0 0.0
  %676 = vmatpush1.msra.mxu0 %v513
  %677 = vmatprep.subr.mxu0 0.0
  %678 = vmatpush1.msra.mxu0 %v512
  %679 = vmatprep.subr.mxu0 0.0
  %680 = vmatpush1.msra.mxu0 %v511
  %681 = vmatprep.subr.mxu0 0.0
  %682 = vmatpush1.msra.mxu0 %v510
  %683 = vmatprep.subr.mxu0 0.0
  %684 = vmatpush1.msra.mxu0 %v509
  %685 = vmatprep.subr.mxu0 0.0
  %686 = vmatpush2.msra.mxu0 %v540
  %687 = vmatprep.subr.mxu0 0.0
  %688 = vmatpush2.msra.mxu0 %v539
  %689 = vmatprep.subr.mxu0 0.0
  %690 = vmatpush2.msra.mxu0 %v538
  %691 = vmatprep.subr.mxu0 0.0
  %692 = vmatpush2.msra.mxu0 %v537
  %693 = vmatprep.subr.mxu0 0.0
  %694 = vmatpush2.msra.mxu0 %v536
  %695 = vmatprep.subr.mxu0 0.0
  %696 = vmatpush2.msra.mxu0 %v535
  %697 = vmatprep.subr.mxu0 0.0
  %698 = vmatpush2.msra.mxu0 %v534
  %699 = vmatprep.subr.mxu0 0.0
  %700 = vmatpush2.msra.mxu0 %v533
  %701 = vmatprep.subr.mxu0 0.0
  %702 = vmatpush2.msra.mxu0 %v532
  %703 = vmatprep.subr.mxu0 0.0
  %704 = vmatpush2.msra.mxu0 %v531
  %705 = vmatprep.subr.mxu0 0.0
  %706 = vmatpush2.msra.mxu0 %v530
  %707 = vmatprep.subr.mxu0 0.0
  %708 = vmatpush2.msra.mxu0 %v529
  %709 = vmatprep.subr.mxu0 0.0
  %710 = vmatpush2.msra.mxu0 %v528
  %711 = vmatprep.subr.mxu0 0.0
  %712 = vmatpush2.msra.mxu0 %v527
  %713 = vmatprep.subr.mxu0 0.0
  %714 = vmatpush2.msra.mxu0 %v526
  %715 = vmatprep.subr.mxu0 0.0
  %716 = vmatpush2.msra.mxu0 %v525
  %717 = vmatprep.mubr.f32.mxu0 %v208
  %718 = vmatmul.mubr.f32.gmra.mxu0 %v166
  %v719 = vpop.f32.mrf.mxu0
  %v720 = vadd.f32 0.0, %v719
  %v721 = vpop.f32.mrf.mxu0
  %722 = vmatprep.mubr.f32.mxu0 %v209
  %723 = vmatmul.mubr.f32.gmra.mxu0 %v167
  %v724 = vpop.f32.mrf.mxu0
  %v725 = vadd.f32 0.0, %v724
  %v726 = vpop.f32.mrf.mxu0
  %727 = vmatprep.mubr.f32.mxu0 %v210
  %728 = vmatmul.mubr.f32.gmra.mxu0 %v168
  %v729 = vpop.f32.mrf.mxu0
  %v730 = vadd.f32 0.0, %v729
  %v731 = vpop.f32.mrf.mxu0
  %732 = vmatprep.mubr.f32.mxu0 %v211
  %733 = vmatmul.mubr.f32.gmra.mxu0 %v169
  %v734 = vpop.f32.mrf.mxu0
  %v735 = vadd.f32 0.0, %v734
  %v736 = vpop.f32.mrf.mxu0
  %737 = vmatprep.mubr.f32.mxu0 %v212
  %738 = vmatmul.mubr.f32.gmra.mxu0 %v170
  %v739 = vpop.f32.mrf.mxu0
  %v740 = vadd.f32 0.0, %v739
  %v741 = vpop.f32.mrf.mxu0
  %742 = vmatprep.mubr.f32.mxu0 %v213
  %743 = vmatmul.mubr.f32.gmra.mxu0 %v171
  %v744 = vpop.f32.mrf.mxu0
  %v745 = vadd.f32 0.0, %v744
  %v746 = vpop.f32.mrf.mxu0
  %747 = vmatprep.mubr.f32.mxu0 %v214
  %748 = vmatmul.mubr.f32.gmra.mxu0 %v172
  %v749 = vpop.f32.mrf.mxu0
  %v750 = vadd.f32 0.0, %v749
  %v751 = vpop.f32.mrf.mxu0
  %752 = vdwg.mxu0
  %753 = vmatprep.subr.mxu0 0.0
  %754 = vmatpush1.msra.mxu0 %v556
  %755 = vmatprep.subr.mxu0 0.0
  %756 = vmatpush1.msra.mxu0 %v555
  %757 = vmatprep.subr.mxu0 0.0
  %758 = vmatpush1.msra.mxu0 %v554
  %759 = vmatprep.subr.mxu0 0.0
  %760 = vmatpush1.msra.mxu0 %v553
  %761 = vmatprep.subr.mxu0 0.0
  %762 = vmatpush1.msra.mxu0 %v552
  %763 = vmatprep.subr.mxu0 0.0
  %764 = vmatpush1.msra.mxu0 %v551
  %765 = vmatprep.subr.mxu0 0.0
  %766 = vmatpush1.msra.mxu0 %v550
  %767 = vmatprep.subr.mxu0 0.0
  %768 = vmatpush1.msra.mxu0 %v549
  %769 = vmatprep.subr.mxu0 0.0
  %770 = vmatpush1.msra.mxu0 %v548
  %771 = vmatprep.subr.mxu0 0.0
  %772 = vmatpush1.msra.mxu0 %v547
  %773 = vmatprep.subr.mxu0 0.0
  %774 = vmatpush1.msra.mxu0 %v546
  %775 = vmatprep.subr.mxu0 0.0
  %776 = vmatpush1.msra.mxu0 %v545
  %777 = vmatprep.subr.mxu0 0.0
  %778 = vmatpush1.msra.mxu0 %v544
  %779 = vmatprep.subr.mxu0 0.0
  %780 = vmatpush1.msra.mxu0 %v543
  %781 = vmatprep.subr.mxu0 0.0
  %782 = vmatpush1.msra.mxu0 %v542
  %783 = vmatprep.subr.mxu0 0.0
  %784 = vmatpush1.msra.mxu0 %v541
  %785 = vmatprep.subr.mxu0 0.0
  %786 = vmatpush2.msra.mxu0 %v572
  %787 = vmatprep.subr.mxu0 0.0
  %788 = vmatpush2.msra.mxu0 %v571
  %789 = vmatprep.subr.mxu0 0.0
  %790 = vmatpush2.msra.mxu0 %v570
  %791 = vmatprep.subr.mxu0 0.0
  %792 = vmatpush2.msra.mxu0 %v569
  %793 = vmatprep.subr.mxu0 0.0
  %794 = vmatpush2.msra.mxu0 %v568
  %795 = vmatprep.subr.mxu0 0.0
  %796 = vmatpush2.msra.mxu0 %v567
  %797 = vmatprep.subr.mxu0 0.0
  %798 = vmatpush2.msra.mxu0 %v566
  %799 = vmatprep.subr.mxu0 0.0
  %800 = vmatpush2.msra.mxu0 %v565
  %801 = vmatprep.subr.mxu0 0.0
  %802 = vmatpush2.msra.mxu0 %v564
  %803 = vmatprep.subr.mxu0 0.0
  %804 = vmatpush2.msra.mxu0 %v563
  %805 = vmatprep.subr.mxu0 0.0
  %806 = vmatpush2.msra.mxu0 %v562
  %807 = vmatprep.subr.mxu0 0.0
  %808 = vmatpush2.msra.mxu0 %v561
  %809 = vmatprep.subr.mxu0 0.0
  %810 = vmatpush2.msra.mxu0 %v560
  %811 = vmatprep.subr.mxu0 0.0
  %812 = vmatpush2.msra.mxu0 %v559
  %813 = vmatprep.subr.mxu0 0.0
  %814 = vmatpush2.msra.mxu0 %v558
  %815 = vmatprep.subr.mxu0 0.0
  %816 = vmatpush2.msra.mxu0 %v557
  %817 = vmatprep.mubr.f32.mxu0 %v292
  %818 = vmatmul.mubr.f32.gmra.mxu0 %v250
  %v819 = vpop.f32.mrf.mxu0
  %v820 = vadd.f32 %v720, %v819
  %v821 = vpop.f32.mrf.mxu0
  %822 = vmatprep.mubr.f32.mxu0 %v293
  %823 = vmatmul.mubr.f32.gmra.mxu0 %v251
  %v824 = vpop.f32.mrf.mxu0
  %v825 = vadd.f32 %v725, %v824
  %v826 = vpop.f32.mrf.mxu0
  %827 = vmatprep.mubr.f32.mxu0 %v294
  %828 = vmatmul.mubr.f32.gmra.mxu0 %v252
  %v829 = vpop.f32.mrf.mxu0
  %v830 = vadd.f32 %v730, %v829
  %v831 = vpop.f32.mrf.mxu0
  %832 = vmatprep.mubr.f32.mxu0 %v295
  %833 = vmatmul.mubr.f32.gmra.mxu0 %v253
  %v834 = vpop.f32.mrf.mxu0
  %v835 = vadd.f32 %v735, %v834
  %v836 = vpop.f32.mrf.mxu0
  %837 = vmatprep.mubr.f32.mxu0 %v296
  %838 = vmatmul.mubr.f32.gmra.mxu0 %v254
  %v839 = vpop.f32.mrf.mxu0
  %v840 = vadd.f32 %v740, %v839
  %v841 = vpop.f32.mrf.mxu0
  %842 = vmatprep.mubr.f32.mxu0 %v297
  %843 = vmatmul.mubr.f32.gmra.mxu0 %v255
  %v844 = vpop.f32.mrf.mxu0
  %v845 = vadd.f32 %v745, %v844
  %v846 = vpop.f32.mrf.mxu0
  %847 = vmatprep.mubr.f32.mxu0 %v298
  %848 = vmatmul.mubr.f32.gmra.mxu0 %v256
  %v849 = vpop.f32.mrf.mxu0
  %v850 = vadd.f32 %v750, %v849
  %v851 = vpop.f32.mrf.mxu0
  %852 = vdwg.mxu0
  %853 = vmatprep.subr.mxu0 0.0
  %854 = vmatpush1.msra.mxu0 %v588
  %855 = vmatprep.subr.mxu0 0.0
  %856 = vmatpush1.msra.mxu0 %v587
  %857 = vmatprep.subr.mxu0 0.0
  %858 = vmatpush1.msra.mxu0 %v586
  %859 = vmatprep.subr.mxu0 0.0
  %860 = vmatpush1.msra.mxu0 %v585
  %861 = vmatprep.subr.mxu0 0.0
  %862 = vmatpush1.msra.mxu0 %v584
  %863 = vmatprep.subr.mxu0 0.0
  %864 = vmatpush1.msra.mxu0 %v583
  %865 = vmatprep.subr.mxu0 0.0
  %866 = vmatpush1.msra.mxu0 %v582
  %867 = vmatprep.subr.mxu0 0.0
  %868 = vmatpush1.msra.mxu0 %v581
  %869 = vmatprep.subr.mxu0 0.0
  %870 = vmatpush1.msra.mxu0 %v580
  %871 = vmatprep.subr.mxu0 0.0
  %872 = vmatpush1.msra.mxu0 %v579
  %873 = vmatprep.subr.mxu0 0.0
  %874 = vmatpush1.msra.mxu0 %v578
  %875 = vmatprep.subr.mxu0 0.0
  %876 = vmatpush1.msra.mxu0 %v577
  %877 = vmatprep.subr.mxu0 0.0
  %878 = vmatpush1.msra.mxu0 %v576
  %879 = vmatprep.subr.mxu0 0.0
  %880 = vmatpush1.msra.mxu0 %v575
  %881 = vmatprep.subr.mxu0 0.0
  %882 = vmatpush1.msra.mxu0 %v574
  %883 = vmatprep.subr.mxu0 0.0
  %884 = vmatpush1.msra.mxu0 %v573
  %885 = vmatprep.subr.mxu0 0.0
  %886 = vmatpush2.msra.mxu0 %v604
  %887 = vmatprep.subr.mxu0 0.0
  %888 = vmatpush2.msra.mxu0 %v603
  %889 = vmatprep.subr.mxu0 0.0
  %890 = vmatpush2.msra.mxu0 %v602
  %891 = vmatprep.subr.mxu0 0.0
  %892 = vmatpush2.msra.mxu0 %v601
  %893 = vmatprep.subr.mxu0 0.0
  %894 = vmatpush2.msra.mxu0 %v600
  %895 = vmatprep.subr.mxu0 0.0
  %896 = vmatpush2.msra.mxu0 %v599
  %897 = vmatprep.subr.mxu0 0.0
  %898 = vmatpush2.msra.mxu0 %v598
  %899 = vmatprep.subr.mxu0 0.0
  %900 = vmatpush2.msra.mxu0 %v597
  %901 = vmatprep.subr.mxu0 0.0
  %902 = vmatpush2.msra.mxu0 %v596
  %903 = vmatprep.subr.mxu0 0.0
  %904 = vmatpush2.msra.mxu0 %v595
  %905 = vmatprep.subr.mxu0 0.0
  %906 = vmatpush2.msra.mxu0 %v594
  %907 = vmatprep.subr.mxu0 0.0
  %908 = vmatpush2.msra.mxu0 %v593
  %909 = vmatprep.subr.mxu0 0.0
  %910 = vmatpush2.msra.mxu0 %v592
  %911 = vmatprep.subr.mxu0 0.0
  %912 = vmatpush2.msra.mxu0 %v591
  %913 = vmatprep.subr.mxu0 0.0
  %914 = vmatpush2.msra.mxu0 %v590
  %915 = vmatprep.subr.mxu0 0.0
  %916 = vmatpush2.msra.mxu0 %v589
  %917 = vmatprep.mubr.f32.mxu0 %v376
  %918 = vmatmul.mubr.f32.gmra.mxu0 %v334
  %v919 = vpop.f32.mrf.mxu0
  %v920 = vadd.f32 %v820, %v919
  %v921 = vpop.f32.mrf.mxu0
  %922 = vmatprep.mubr.f32.mxu0 %v377
  %923 = vmatmul.mubr.f32.gmra.mxu0 %v335
  %v924 = vpop.f32.mrf.mxu0
  %v925 = vadd.f32 %v825, %v924
  %v926 = vpop.f32.mrf.mxu0
  %927 = vmatprep.mubr.f32.mxu0 %v378
  %928 = vmatmul.mubr.f32.gmra.mxu0 %v336
  %v929 = vpop.f32.mrf.mxu0
  %v930 = vadd.f32 %v830, %v929
  %v931 = vpop.f32.mrf.mxu0
  %932 = vmatprep.mubr.f32.mxu0 %v379
  %933 = vmatmul.mubr.f32.gmra.mxu0 %v337
  %v934 = vpop.f32.mrf.mxu0
  %v935 = vadd.f32 %v835, %v934
  %v936 = vpop.f32.mrf.mxu0
  %937 = vmatprep.mubr.f32.mxu0 %v380
  %938 = vmatmul.mubr.f32.gmra.mxu0 %v338
  %v939 = vpop.f32.mrf.mxu0
  %v940 = vadd.f32 %v840, %v939
  %v941 = vpop.f32.mrf.mxu0
  %942 = vmatprep.mubr.f32.mxu0 %v381
  %943 = vmatmul.mubr.f32.gmra.mxu0 %v339
  %v944 = vpop.f32.mrf.mxu0
  %v945 = vadd.f32 %v845, %v944
  %v946 = vpop.f32.mrf.mxu0
  %947 = vmatprep.mubr.f32.mxu0 %v382
  %948 = vmatmul.mubr.f32.gmra.mxu0 %v340
  %v949 = vpop.f32.mrf.mxu0
  %v950 = vadd.f32 %v850, %v949
  %v951 = vpop.f32.mrf.mxu0
  %952 = vdwg.mxu0
  %953 = vmatprep.subr.mxu0 0.0
  %954 = vmatpush1.msra.mxu0 %v620
  %955 = vmatprep.subr.mxu0 0.0
  %956 = vmatpush1.msra.mxu0 %v619
  %957 = vmatprep.subr.mxu0 0.0
  %958 = vmatpush1.msra.mxu0 %v618
  %959 = vmatprep.subr.mxu0 0.0
  %960 = vmatpush1.msra.mxu0 %v617
  %961 = vmatprep.subr.mxu0 0.0
  %962 = vmatpush1.msra.mxu0 %v616
  %963 = vmatprep.subr.mxu0 0.0
  %964 = vmatpush1.msra.mxu0 %v615
  %965 = vmatprep.subr.mxu0 0.0
  %966 = vmatpush1.msra.mxu0 %v614
  %967 = vmatprep.subr.mxu0 0.0
  %968 = vmatpush1.msra.mxu0 %v613
  %969 = vmatprep.subr.mxu0 0.0
  %970 = vmatpush1.msra.mxu0 %v612
  %971 = vmatprep.subr.mxu0 0.0
  %972 = vmatpush1.msra.mxu0 %v611
  %973 = vmatprep.subr.mxu0 0.0
  %974 = vmatpush1.msra.mxu0 %v610
  %975 = vmatprep.subr.mxu0 0.0
  %976 = vmatpush1.msra.mxu0 %v609
  %977 = vmatprep.subr.mxu0 0.0
  %978 = vmatpush1.msra.mxu0 %v608
  %979 = vmatprep.subr.mxu0 0.0
  %980 = vmatpush1.msra.mxu0 %v607
  %981 = vmatprep.subr.mxu0 0.0
  %982 = vmatpush1.msra.mxu0 %v606
  %983 = vmatprep.subr.mxu0 0.0
  %984 = vmatpush1.msra.mxu0 %v605
  %985 = vmatprep.subr.mxu0 0.0
  %986 = vmatpush2.msra.mxu0 %v636
  %987 = vmatprep.subr.mxu0 0.0
  %988 = vmatpush2.msra.mxu0 %v635
  %989 = vmatprep.subr.mxu0 0.0
  %990 = vmatpush2.msra.mxu0 %v634
  %991 = vmatprep.subr.mxu0 0.0
  %992 = vmatpush2.msra.mxu0 %v633
  %993 = vmatprep.subr.mxu0 0.0
  %994 = vmatpush2.msra.mxu0 %v632
  %995 = vmatprep.subr.mxu0 0.0
  %996 = vmatpush2.msra.mxu0 %v631
  %997 = vmatprep.subr.mxu0 0.0
  %998 = vmatpush2.msra.mxu0 %v630
  %999 = vmatprep.subr.mxu0 0.0
  %1000 = vmatpush2.msra.mxu0 %v629
  %1001 = vmatprep.subr.mxu0 0.0
  %1002 = vmatpush2.msra.mxu0 %v628
  %1003 = vmatprep.subr.mxu0 0.0
  %1004 = vmatpush2.msra.mxu0 %v627
  %1005 = vmatprep.subr.mxu0 0.0
  %1006 = vmatpush2.msra.mxu0 %v626
  %1007 = vmatprep.subr.mxu0 0.0
  %1008 = vmatpush2.msra.mxu0 %v625
  %1009 = vmatprep.subr.mxu0 0.0
  %1010 = vmatpush2.msra.mxu0 %v624
  %1011 = vmatprep.subr.mxu0 0.0
  %1012 = vmatpush2.msra.mxu0 %v623
  %1013 = vmatprep.subr.mxu0 0.0
  %1014 = vmatpush2.msra.mxu0 %v622
  %1015 = vmatprep.subr.mxu0 0.0
  %1016 = vmatpush2.msra.mxu0 %v621
  %1017 = vmatprep.mubr.f32.mxu0 %v460
  %1018 = vmatmul.mubr.f32.gmra.mxu0 %v418
  %v1019 = vpop.f32.mrf.mxu0
  %v1020 = vadd.f32 %v920, %v1019
  %v1021 = vpop.f32.mrf.mxu0
  %1022 = vmatprep.mubr.f32.mxu0 %v461
  %1023 = vmatmul.mubr.f32.gmra.mxu0 %v419
  %v1024 = vpop.f32.mrf.mxu0
  %v1025 = vadd.f32 %v925, %v1024
  %v1026 = vpop.f32.mrf.mxu0
  %1027 = vmatprep.mubr.f32.mxu0 %v462
  %1028 = vmatmul.mubr.f32.gmra.mxu0 %v420
  %v1029 = vpop.f32.mrf.mxu0
  %v1030 = vadd.f32 %v930, %v1029
  %v1031 = vpop.f32.mrf.mxu0
  %1032 = vmatprep.mubr.f32.mxu0 %v463
  %1033 = vmatmul.mubr.f32.gmra.mxu0 %v421
  %v1034 = vpop.f32.mrf.mxu0
  %v1035 = vadd.f32 %v935, %v1034
  %v1036 = vpop.f32.mrf.mxu0
  %1037 = vmatprep.mubr.f32.mxu0 %v464
  %1038 = vmatmul.mubr.f32.gmra.mxu0 %v422
  %v1039 = vpop.f32.mrf.mxu0
  %v1040 = vadd.f32 %v940, %v1039
  %v1041 = vpop.f32.mrf.mxu0
  %1042 = vmatprep.mubr.f32.mxu0 %v465
  %1043 = vmatmul.mubr.f32.gmra.mxu0 %v423
  %v1044 = vpop.f32.mrf.mxu0
  %v1045 = vadd.f32 %v945, %v1044
  %v1046 = vpop.f32.mrf.mxu0
  %1047 = vmatprep.mubr.f32.mxu0 %v466
  %1048 = vmatmul.mubr.f32.gmra.mxu0 %v424
  %v1049 = vpop.f32.mrf.mxu0
  %v1050 = vadd.f32 %v950, %v1049
  %v1051 = vpop.f32.mrf.mxu0
  %1052 = vdwg.mxu0
  %1053 = vmatprep.subr.mxu0 0.0
  %1054 = vmatpush1.msra.mxu0 %v652
  %1055 = vmatprep.subr.mxu0 0.0
  %1056 = vmatpush1.msra.mxu0 %v651
  %1057 = vmatprep.subr.mxu0 0.0
  %1058 = vmatpush1.msra.mxu0 %v650
  %1059 = vmatprep.subr.mxu0 0.0
  %1060 = vmatpush1.msra.mxu0 %v649
  %1061 = vmatprep.subr.mxu0 0.0
  %1062 = vmatpush1.msra.mxu0 %v648
  %1063 = vmatprep.subr.mxu0 0.0
  %1064 = vmatpush1.msra.mxu0 %v647
  %1065 = vmatprep.subr.mxu0 0.0
  %1066 = vmatpush1.msra.mxu0 %v646
  %1067 = vmatprep.subr.mxu0 0.0
  %1068 = vmatpush1.msra.mxu0 %v645
  %1069 = vmatprep.subr.mxu0 0.0
  %1070 = vmatpush1.msra.mxu0 %v644
  %1071 = vmatprep.subr.mxu0 0.0
  %1072 = vmatpush1.msra.mxu0 %v643
  %1073 = vmatprep.subr.mxu0 0.0
  %1074 = vmatpush1.msra.mxu0 %v642
  %1075 = vmatprep.subr.mxu0 0.0
  %1076 = vmatpush1.msra.mxu0 %v641
  %1077 = vmatprep.subr.mxu0 0.0
  %1078 = vmatpush1.msra.mxu0 %v640
  %1079 = vmatprep.subr.mxu0 0.0
  %1080 = vmatpush1.msra.mxu0 %v639
  %1081 = vmatprep.subr.mxu0 0.0
  %1082 = vmatpush1.msra.mxu0 %v638
  %1083 = vmatprep.subr.mxu0 0.0
  %1084 = vmatpush1.msra.mxu0 %v637
  %1085 = vmatprep.subr.mxu0 0.0
  %1086 = vmatpush2.msra.mxu0 0.0
  %1087 = vmatprep.subr.mxu0 0.0
  %1088 = vmatpush2.msra.mxu0 0.0
  %1089 = vmatprep.subr.mxu0 0.0
  %1090 = vmatpush2.msra.mxu0 0.0
  %1091 = vmatprep.subr.mxu0 0.0
  %1092 = vmatpush2.msra.mxu0 0.0
  %1093 = vmatprep.subr.mxu0 0.0
  %1094 = vmatpush2.msra.mxu0 0.0
  %1095 = vmatprep.subr.mxu0 0.0
  %1096 = vmatpush2.msra.mxu0 0.0
  %1097 = vmatprep.subr.mxu0 0.0
  %1098 = vmatpush2.msra.mxu0 0.0
  %1099 = vmatprep.subr.mxu0 0.0
  %1100 = vmatpush2.msra.mxu0 0.0
  %1101 = vmatprep.subr.mxu0 0.0
  %1102 = vmatpush2.msra.mxu0 0.0
  %1103 = vmatprep.subr.mxu0 0.0
  %1104 = vmatpush2.msra.mxu0 0.0
  %1105 = vmatprep.subr.mxu0 0.0
  %1106 = vmatpush2.msra.mxu0 0.0
  %1107 = vmatprep.subr.mxu0 0.0
  %1108 = vmatpush2.msra.mxu0 0.0
  %1109 = vmatprep.subr.mxu0 0.0
  %1110 = vmatpush2.msra.mxu0 0.0
  %1111 = vmatprep.subr.mxu0 0.0
  %1112 = vmatpush2.msra.mxu0 0.0
  %1113 = vmatprep.subr.mxu0 0.0
  %1114 = vmatpush2.msra.mxu0 0.0
  %1115 = vmatprep.subr.mxu0 0.0
  %1116 = vmatpush2.msra.mxu0 0.0
  %1117 = vmatprep.mubr.f32.mxu0 0.0
  %1118 = vmatmul.mubr.f32.gmra.mxu0 %v502
  %v1119 = vpop.f32.mrf.mxu0
  %v1120 = vadd.f32 %v1020, %v1119
  %v1121 = vpop.f32.mrf.mxu0
  %1122 = vmatprep.mubr.f32.mxu0 0.0
  %1123 = vmatmul.mubr.f32.gmra.mxu0 %v503
  %v1124 = vpop.f32.mrf.mxu0
  %v1125 = vadd.f32 %v1025, %v1124
  %v1126 = vpop.f32.mrf.mxu0
  %1127 = vmatprep.mubr.f32.mxu0 0.0
  %1128 = vmatmul.mubr.f32.gmra.mxu0 %v504
  %v1129 = vpop.f32.mrf.mxu0
  %v1130 = vadd.f32 %v1030, %v1129
  %v1131 = vpop.f32.mrf.mxu0
  %1132 = vmatprep.mubr.f32.mxu0 0.0
  %1133 = vmatmul.mubr.f32.gmra.mxu0 %v505
  %v1134 = vpop.f32.mrf.mxu0
  %v1135 = vadd.f32 %v1035, %v1134
  %v1136 = vpop.f32.mrf.mxu0
  %1137 = vmatprep.mubr.f32.mxu0 0.0
  %1138 = vmatmul.mubr.f32.gmra.mxu0 %v506
  %v1139 = vpop.f32.mrf.mxu0
  %v1140 = vadd.f32 %v1040, %v1139
  %v1141 = vpop.f32.mrf.mxu0
  %1142 = vmatprep.mubr.f32.mxu0 0.0
  %1143 = vmatmul.mubr.f32.gmra.mxu0 %v507
  %v1144 = vpop.f32.mrf.mxu0
  %v1145 = vadd.f32 %v1045, %v1144
  %v1146 = vpop.f32.mrf.mxu0
  %1147 = vmatprep.mubr.f32.mxu0 0.0
  %1148 = vmatmul.mubr.f32.gmra.mxu0 %v508
  %v1149 = vpop.f32.mrf.mxu0
  %v1150 = vadd.f32 %v1050, %v1149
  %v1151 = vpop.f32.mrf.mxu0
  %1152 = vdwg.mxu0
  %vm1153 = vcmask 261120
  %1154 = vst.msk [vmem:[%s5] sm:$0xff] %vm1153, %v1120
  %1155 = vst.msk [vmem:[%s5 + $0x8] sm:$0xff] %vm1153, %v1125
  %1156 = vst.msk [vmem:[%s5 + $0x10] sm:$0xff] %vm1153, %v1130
  %1157 = vst.msk [vmem:[%s5 + $0x18] sm:$0xff] %vm1153, %v1135
  %1158 = vst.msk [vmem:[%s5 + $0x20] sm:$0xff] %vm1153, %v1140
  %1159 = vst.msk [vmem:[%s5 + $0x28] sm:$0xff] %vm1153, %v1145
  %1160 = vst.msk [vmem:[%s5 + $0x30] sm:$0xff] %vm1153, %v1150
  // Predicated region
  $region22: #{tpu_custom_call.1} parent=0 // pred_check
    _
  $region23: #{tpu_custom_call.1} parent=0 // pred_check_branch
    %1162 = sbr.rel (0) target = $region25
  $region24: #{tpu_custom_call.1} parent=0 // pred_region
    _
  $region25: #{tpu_custom_call.1} parent=0 // pred_fallthru
    _
  // Predicated region
  $region26: #{tpu_custom_call.1} parent=0 // pred_check
    _
  $region27: #{tpu_custom_call.1} parent=0 // pred_check_branch
    %1164 = sbr.rel (0) target = $region29
  $region28: #{tpu_custom_call.1} parent=0 // pred_region
    _
  $region29: #{tpu_custom_call.1} parent=0 // pred_fallthru
    _

</llo_original>
